<compile_context>
chip_gen: v5e
topology: v5e:2x2
jax: 0.10.0
libtpu: 0.0.40
codegen_flags: <defaults>
</compile_context>

<pallas_src>
import functools
import math

import jax
import jax.numpy as jnp
from jax.experimental import pallas as pl
from jax.experimental.pallas import tpu as pltpu


def _attention_fusion_kernel(x_ref, o_ref, *, inv_sqrt_dim):
    # x_ref: (cav, C, T) input dtype   o_ref: (C, T) output dtype
    x = x_ref[...].astype(jnp.float32)                          # (cav, C, T)
    q = x[0]                                                    # (C, T)
    # score_j[n] = sum_c x[0, c, n] * x[j, c, n] / sqrt(C)
    scores = jnp.sum(q[None, :, :] * x, axis=1) * inv_sqrt_dim  # (cav, T)
    # softmax over the cav axis, restricted to row 0 (the only row the
    # PyTorch module keeps). Normalization deferred to the end.
    m = jnp.max(scores, axis=0, keepdims=True)                  # (1, T)
    e = jnp.exp(scores - m)                                     # (cav, T)
    denom = jnp.sum(e, axis=0, keepdims=True)                   # (1, T)
    # un-normalized context[c, n] = sum_j e[j, n] * x[j, c, n]
    ctx = jnp.sum(e[:, None, :] * x, axis=0)                    # (C, T)
    out = ctx * pl.reciprocal(denom, approx=False)              # exact 1/x
    o_ref[...] = out.astype(o_ref.dtype)


def _choose_tile(n, cav, c, in_itemsize, out_itemsize, tile_budget_bytes):
    """Largest multiple-of-128 spatial tile that fits the VMEM tile budget."""
    per_lane = (
        2 * cav * c * in_itemsize        # double-buffered input stream
        + 2 * c * out_itemsize           # double-buffered output stream
        + (cav * c + 3 * cav + 2 * c) * 4  # in-kernel f32 intermediates
    )
    max_k = max(1, min(32, tile_budget_bytes // (per_lane * 128)))  # T <= 4096
    max_t = 128 * max_k

    # Largest candidate whose zero-padding overhead stays small
    # (<= one extra 128-lane block or ~6% of N, whichever is larger).
    overhead_cap = max(n + 128, int(n * 1.0625))
    t = 128
    cand = 256
    while cand <= max_t:
        if pl.cdiv(n, cand) * cand <= overhead_cap:
            t = cand
        cand += 128

    # Prefer >= 2 grid steps so v7x megacore can shard the spatial grid.
    if pl.cdiv(n, t) == 1 and n > 128 and t > 128:
        t = max(128, (t // 2 // 128) * 128)
    return t


def attention_fusion(x):
    """x: (cav_num, C, H, W) -> (C, H, W) fused feature of agent 0."""
    cav, C, H, W = x.shape
    N = H * W
    xr = x.reshape(cav, C, N)  # keep native dtype; upcast happens in-kernel

    in_isz = jnp.dtype(x.dtype).itemsize
    out_dtype = x.dtype
    out_isz = jnp.dtype(out_dtype).itemsize

    # Per-generation VMEM budget (v7x: 64 MiB physical -> ~48 MiB limit;
    # v5e/v6e: 128 MiB physical -> 96 MiB limit, well above the 16/32 MiB
    # default scoped limits).
    try:
        vmem_cap = int(pltpu.get_tpu_info().vmem_capacity_bytes)
    except Exception:
        vmem_cap = 64 * 1024 * 1024
    vmem_limit = int(min((vmem_cap * 3) // 4, 96 * 1024 * 1024))
    tile_budget = (vmem_limit * 3) // 5

    T = _choose_tile(N, cav, C, in_isz, out_isz, tile_budget)
    grid_n = pl.cdiv(N, T)
    N_total = grid_n * T
    if N_total != N:
        # Zero padding: padded lanes give scores 0 -> uniform softmax -> 0
        # output; they are sliced off below, so correctness is unaffected.
        xr = jnp.pad(xr, ((0, 0), (0, 0), (0, N_total - N)))

    kernel = functools.partial(
        _attention_fusion_kernel, inv_sqrt_dim=1.0 / math.sqrt(C)
    )

    out = pl.pallas_call(
        kernel,
        out_shape=jax.ShapeDtypeStruct((C, N_total), out_dtype),
        grid_spec=pltpu.PrefetchScalarGridSpec(
            num_scalar_prefetch=0,
            grid=(grid_n,),
            in_specs=[pl.BlockSpec((cav, C, T), lambda n: (0, 0, n))],
            out_specs=pl.BlockSpec((C, T), lambda n: (0, n)),
        ),
        compiler_params=pltpu.CompilerParams(
            dimension_semantics=("parallel",),
            vmem_limit_bytes=vmem_limit,
        ),
    )(xr)

    return out[:, :N].reshape(C, H, W)


def _reference(x):
    # Pure-JAX transcription of the PyTorch forward.
    cav, C, H, W = x.shape
    xs = x.astype(jnp.float32).reshape(cav, C, H * W).transpose(2, 0, 1)
    score = jnp.einsum("nic,njc->nij", xs, xs) / jnp.sqrt(jnp.float32(C))
    attn = jax.nn.softmax(score, axis=-1)
    ctx = jnp.einsum("nij,njc->nic", attn, xs)              # (N, cav, C)
    return ctx.transpose(1, 2, 0).reshape(cav, C, H, W)[0]  # (C, H, W)


if __name__ == "__main__":
    key = jax.random.PRNGKey(0)

    # Main config (spatial size a multiple of 128 lanes after flattening).
    cav_num, C, H, W = 2, 4, 16, 16
    x = jax.random.normal(key, (cav_num, C, H, W), dtype=jnp.float32)
    out = jax.block_until_ready(attention_fusion(x))
    ref = _reference(x)
    assert out.shape == (C, H, W)
    assert jnp.allclose(out, ref, atol=1e-5, rtol=1e-5), (
        "Pallas kernel result does not match reference (divisible case)"
    )

    # Second config exercising the padded (N % 128 != 0) path.
    cav2, C2, H2, W2 = 3, 8, 10, 10
    x2 = jax.random.normal(
        jax.random.PRNGKey(0), (cav2, C2, H2, W2), dtype=jnp.float32
    )
    out2 = jax.block_until_ready(attention_fusion(x2))
    ref2 = _reference(x2)
    assert out2.shape == (C2, H2, W2)
    assert jnp.allclose(out2, ref2, atol=1e-5, rtol=1e-5), (
        "Pallas kernel result does not match reference (padded case)"
    )

    print("KERNEL_OK")
</pallas_src>

<mosaic_0001>
module attributes {stable_mosaic.version = 11 : i64} {
  func.func @_attention_fusion_kernel(%arg0: i32, %arg1: memref<2x4x128xf32, #tpu.memory_space<vmem>>, %arg2: memref<4x128xf32, #tpu.memory_space<vmem>>) attributes {dimension_semantics = [#tpu.dimension_semantics<parallel>], iteration_bounds = array<i64: 2>, scalar_prefetch = 0 : i64, scratch_operands = 0 : i64, tpu.core_type = #tpu.core_type<tc>, window_params = [{transform_indices = @transform_0, window_bounds = array<i64: 2, 4, 128>}, {transform_indices = @transform_1, window_bounds = array<i64: 4, 128>}]} {
    %c0 = arith.constant 0 : index
    %c0_0 = arith.constant 0 : index
    %c0_1 = arith.constant 0 : index
    %0 = vector.load %arg1[%c0, %c0_0, %c0_1] : memref<2x4x128xf32, #tpu.memory_space<vmem>>, vector<2x4x128xf32>
    %1 = vector.extract_strided_slice %0 {offsets = [0, 0, 0], sizes = [1, 4, 128], strides = [1, 1, 1]} : vector<2x4x128xf32> to vector<1x4x128xf32>
    %2 = vector.shape_cast %1 : vector<1x4x128xf32> to vector<4x128xf32>
    %3 = vector.shape_cast %2 : vector<4x128xf32> to vector<1x4x128xf32>
    %4 = vector.broadcast %3 : vector<1x4x128xf32> to vector<2x4x128xf32>
    %5 = arith.mulf %4, %0 : vector<2x4x128xf32>
    %cst = arith.constant dense<0.000000e+00> : vector<2x128xf32>
    %6 = vector.multi_reduction <add>, %5, %cst [1] : vector<2x4x128xf32> to vector<2x128xf32>
    %cst_2 = arith.constant 5.000000e-01 : f32
    %7 = vector.broadcast %cst_2 : f32 to vector<2x128xf32>
    %8 = arith.mulf %6, %7 : vector<2x128xf32>
    %cst_3 = arith.constant dense<0xFF800000> : vector<128xf32>
    %9 = vector.multi_reduction <maximumf>, %8, %cst_3 [0] : vector<2x128xf32> to vector<128xf32>
    %10 = vector.shape_cast %9 : vector<128xf32> to vector<1x128xf32>
    %11 = vector.broadcast %10 : vector<1x128xf32> to vector<2x128xf32>
    %12 = arith.subf %8, %11 : vector<2x128xf32>
    %13 = math.exp %12 : vector<2x128xf32>
    %cst_4 = arith.constant dense<0.000000e+00> : vector<128xf32>
    %14 = vector.multi_reduction <add>, %13, %cst_4 [0] : vector<2x128xf32> to vector<128xf32>
    %15 = vector.shape_cast %14 : vector<128xf32> to vector<1x128xf32>
    %16 = vector.shape_cast %13 : vector<2x128xf32> to vector<2x1x128xf32>
    %17 = vector.broadcast %16 : vector<2x1x128xf32> to vector<2x4x128xf32>
    %18 = arith.mulf %17, %0 : vector<2x4x128xf32>
    %cst_5 = arith.constant dense<0.000000e+00> : vector<4x128xf32>
    %19 = vector.multi_reduction <add>, %18, %cst_5 [0] : vector<2x4x128xf32> to vector<4x128xf32>
    %20 = tpu.reciprocal %15 : vector<1x128xf32> -> vector<1x128xf32>
    %21 = vector.broadcast %20 : vector<1x128xf32> to vector<4x128xf32>
    %22 = arith.mulf %19, %21 : vector<4x128xf32>
    %c0_6 = arith.constant 0 : index
    %c0_7 = arith.constant 0 : index
    %23 = vector.load %arg2[%c0_6, %c0_7] : memref<4x128xf32, #tpu.memory_space<vmem>>, vector<4x128xf32>
    tpu.vector_store %arg2[%c0_6, %c0_7], %22 {strides = array<i32>} : memref<4x128xf32, #tpu.memory_space<vmem>>, vector<4x128xf32>,
    return
  }
  func.func @transform_0(%arg0: i32) -> (i32, i32, i32) {
    %c0_i32 = arith.constant 0 : i32
    %c0_i32_0 = arith.constant 0 : i32
    %c0_i32_1 = arith.constant 0 : i32
    return %c0_i32, %c0_i32_0, %arg0 : i32, i32, i32
  }
  func.func @transform_1(%arg0: i32) -> (i32, i32) {
    %c0_i32 = arith.constant 0 : i32
    %c0_i32_0 = arith.constant 0 : i32
    return %c0_i32, %arg0 : i32, i32
  }
}

</mosaic_0001>

<llo_original>
// kernel: tpu_custom_call.1
$region0: #{tpu_custom_call.1}
  #allocation0 [shape = 'u32[]', space=smem, size = 0x4, offset = 0x4, fixed_abs, tag = 'smem constant byte address 0x4 - core index']
  #allocation1 [shape = 'u32[72,128]{1,0:T(1,128)}', space=vmem, size = 0x9000, scoped, tag = 'internal scratch']
  %s0 = inlined_call_operand.hbm [shape: f32[2,4,256], index: 0, kind: input, shape index: {}]
  %s1 = inlined_call_operand.hbm [shape: f32[4,256], index: 1, kind: output, shape index: {}]
  %s2 = sld [smem:[#allocation0]]
  $region41: #{tpu_custom_call.1} parent=0
    _
  %s4 = ssub.s32 1, %s2
  %s5 = scalar_select 0, %s4, %s2
  $region1: #{tpu_custom_call.1} parent=0
    #allocation2 [shape = 'u8[8192]{0}', space=vmem, size = 0x2000, scoped, tag = 'input window, operand 0']
    #allocation3 [shape = 's32[2]{0}', space=sflag, size = 0x8, scoped, tag = 'scoped memory for tpu_custom_call.1']
    #allocation4 [shape = 's32[2]{0}', space=sflag, size = 0x8, scoped, tag = 'scoped memory for tpu_custom_call.1']
    #allocation5 [shape = 'u8[4096]{0}', space=vmem, size = 0x1000, scoped, tag = 'output window, operand 0']
    %6 = vsyncpa [#allocation3], 0
    %s7 = scalar_lea.sflag [#allocation3], 1
    %8 = vsyncpa %s7, 0
    %9 = vsyncpa [#allocation4], 0
    %s10 = scalar_lea.sflag [#allocation4], 1
    %11 = vsyncpa %s10, 0
    loop: start=0, step=1, limit=4
    $region2: #{tpu_custom_call.1} parent=1 // loop_pre_header
      _
    $region3: #{tpu_custom_call.1} parent=1 // loop_header
      %s13 = sphi 0, %s17
      %p14 = scmp.ge.s32.totalorder %s13, 4
      %s23 = sphi 0, %s25
      %s26 = sphi 0, %s23
      %s27 = sphi 0, %s26
      %s43 = sphi 0, %s27
      %s49 = sphi 0, %s51
      %s52 = sphi 0, %s49
      %s53 = sphi 0, %s52
      %s69 = sphi 0, %s53
    $region4: #{tpu_custom_call.1} parent=1 // loop_header_branch
      %16 = sbr.rel (%p14) target = $region8
    $region5: #{tpu_custom_call.1} parent=1 // loop_body
      %s18 = ssub.s32 %s13, 1
      %s19 = ssub.s32 %s13, 2
      %s20 = sadd.s32 %s13, 1
      %s21 = ssub.s32 %s13, %s20
      %p22 = scmp.eq.s32.totalorder %s21, 0
      %s24 = sadd.s32 %s23, 1
      %s25 = scalar_select %p22, %s23, %s24
      %p28 = pneg %p22
      %p29 = scmp.eq.s32.totalorder %s13, 1
      %p30 = por %p28, %p29
      %p31 = scmp.ne.s32.totalorder %s23, %s26
      %p32 = scmp.eq.s32.totalorder %s13, 0
      %p33 = por %p31, %p32
      %p34 = scmp.ne.s32.totalorder %s23, %s26
      %p35 = scmp.eq.s32.totalorder %s18, 1
      %p36 = por %p34, %p35
      %p37 = scmp.ne.s32.totalorder %s26, %s27
      %p38 = scmp.eq.s32.totalorder %s18, 0
      %p39 = por %p37, %p38
      %p40 = scmp.ne.s32.totalorder %s26, %s27
      %p41 = scmp.eq.s32.totalorder %s19, 1
      %p42 = por %p40, %p41
      %p44 = scmp.ne.s32.totalorder %s27, %s43
      %p45 = scmp.eq.s32.totalorder %s19, 0
      %p46 = por %p44, %p45
      %s47 = ssub.s32 %s13, %s20
      %p48 = scmp.eq.s32.totalorder %s47, 0
      %s50 = sadd.s32 %s49, 1
      %s51 = scalar_select %p48, %s49, %s50
      %p54 = pneg %p48
      %p55 = scmp.eq.s32.totalorder %s13, 1
      %p56 = por %p54, %p55
      %p57 = scmp.ne.s32.totalorder %s49, %s52
      %p58 = scmp.eq.s32.totalorder %s13, 0
      %p59 = por %p57, %p58
      %p60 = scmp.ne.s32.totalorder %s49, %s52
      %p61 = scmp.eq.s32.totalorder %s18, 1
      %p62 = por %p60, %p61
      %p63 = scmp.ne.s32.totalorder %s52, %s53
      %p64 = scmp.eq.s32.totalorder %s18, 0
      %p65 = por %p63, %p64
      %p66 = scmp.ne.s32.totalorder %s52, %s53
      %p67 = scmp.eq.s32.totalorder %s19, 1
      %p68 = por %p66, %p67
      %p70 = scmp.ne.s32.totalorder %s53, %s69
      %p71 = scmp.eq.s32.totalorder %s19, 0
      %p72 = por %p70, %p71
      %p73 = scmp.le.s32.totalorder 1, %s13
      %p74 = scmp.lt.s32.totalorder %s13, 3
      %p75 = pnand %p73, %p74
      %p76 = pneg %p75
      // Predicated region
      $region9: #{tpu_custom_call.1} parent=5 // pred_check
        _
      $region10: #{tpu_custom_call.1} parent=5 // pred_check_branch
        %78 = sbr.rel (%p75) target = $region12
      $region11: #{tpu_custom_call.1} parent=5 // pred_region
        %s79 = ssub.s32 %s13, 1
      $region12: #{tpu_custom_call.1} parent=5 // pred_fallthru
        _
      %p80 = scmp.lt.s32.totalorder %s13, 2
      // Predicated region
      $region13: #{tpu_custom_call.1} parent=5 // pred_check
        %p81 = pneg %p80
      $region14: #{tpu_custom_call.1} parent=5 // pred_check_branch
        %83 = sbr.rel (%p81) target = $region16
      $region15: #{tpu_custom_call.1} parent=5 // pred_region
        // Predicated region
        $region17: #{tpu_custom_call.1} parent=15 // pred_check
          %p84 = pneg %p33
        $region18: #{tpu_custom_call.1} parent=15 // pred_check_branch
          %86 = sbr.rel (%p84) target = $region20
        $region19: #{tpu_custom_call.1} parent=15 // pred_region
          %s87 = sand.u32 %s23, 1
          %s88 = scalar_lea.sflag [#allocation3], %s87
          %s89 = sand.u32 %s23, 1
          %s90 = smul.addr %s89, 8
          %s91 = scalar_lea.vmem [#allocation2], %s90
          %93 = vsyncadd %s88, 0
          %s94 = smul.addr %s13, 4
          %s95 = scalar_lea.hbm %s0, %s94
          %s96 = sshll.u32 %s95, 4
          %s97 = int_to_ptr.hbm [resolvable:$true] %s96
          %s98 = sshll.u32 %s91, 4
          %s99 = int_to_ptr.vmem [resolvable:$true] %s98
          %104 = dma.hbm_to_vmem [thread:$0]  %s97, 128, %s99, %s88, 128, 64, 4
        $region20: #{tpu_custom_call.1} parent=15 // pred_fallthru
          _
      $region16: #{tpu_custom_call.1} parent=5 // pred_fallthru
        _
      %p105 = scmp.le.s32.totalorder 1, %s13
      %p106 = scmp.lt.s32.totalorder %s13, 3
      %p107 = pnand %p105, %p106
      %p108 = pneg %p107
      // Predicated region
      $region21: #{tpu_custom_call.1} parent=5 // pred_check
        _
      $region22: #{tpu_custom_call.1} parent=5 // pred_check_branch
        %110 = sbr.rel (%p107) target = $region24
      $region23: #{tpu_custom_call.1} parent=5 // pred_region
        %s111 = ssub.s32 %s13, 1
        %s112 = sand.u32 %s26, 1
        %s113 = scalar_lea.sflag [#allocation3], %s112
        %s114 = sand.u32 %s26, 1
        %s115 = smul.addr %s114, 8
        %s116 = scalar_lea.vmem [#allocation2], %s115
        // Predicated region
        $region25: #{tpu_custom_call.1} parent=23 // pred_check
          %p117 = pneg %p39
        $region26: #{tpu_custom_call.1} parent=23 // pred_check_branch
          %119 = sbr.rel (%p117) target = $region28
        $region27: #{tpu_custom_call.1} parent=23 // pred_region
          %121 = dma.done %s113, 128
        $region28: #{tpu_custom_call.1} parent=23 // pred_fallthru
          _
        %s122 = sand.u32 %s26, 1
        %s123 = scalar_lea.sflag [#allocation3], %s122
        %s124 = sand.u32 %s26, 1
        %s125 = smul.addr %s124, 8
        %s126 = scalar_lea.vmem [#allocation2], %s125
        %p127 = pneg %p39
        %p128 = pneg %p36
        %p129 = pneg %p65
        %p130 = pneg %p62
        %s131 = sand.u32 %s52, 1
        %s132 = scalar_lea.sflag [#allocation4], %s131
        %s133 = sand.u32 %s52, 1
        %s134 = smul.addr %s133, 4
        %s135 = scalar_lea.vmem [#allocation5], %s134
        %v136 = vld [vmem:[%s116] sm:$0xf]
        %v137 = vld [vmem:[%s116 + $0x4] sm:$0xf]
        %v138 = vmul.f32 %v136, %v136
        %v139 = vmul.f32 %v136, %v137
        %vm140 = vcmask 1043456
        %v141 = vsel %vm140, %v138, 0.0
        %v142 = vrot.slane %v141, 4
        %v143 = vadd.f32 %v141, %v142
        %v144 = vrot.slane %v143, 2
        %v145 = vadd.f32 %v143, %v144
        %v146 = vrot.slane %v145, 1
        %v147 = vadd.f32 %v145, %v146
        %v148 = vsel %vm140, %v139, 0.0
        %v149 = vrot.slane %v148, 4
        %v150 = vadd.f32 %v148, %v149
        %v151 = vrot.slane %v150, 2
        %v152 = vadd.f32 %v150, %v151
        %v153 = vrot.slane %v152, 1
        %v154 = vadd.f32 %v152, %v153
        %v155 = vmul.f32 %v147, 0.5
        %v156 = vmul.f32 %v154, 0.5
        %v157 = vmax.f32 %v155, %v156
        %v158 = vsub.f32 %v155, %v157
        %v159 = vsub.f32 %v156, %v157
        %v160 = vmul.f32 %v158, 1.442695
        %v161 = vpow.pop %v160
        %v162 = vmul.f32 %v159, 1.442695
        %v163 = vpow.pop %v162
        %v166 = vrot.slane %v163, 7
        %vm167 = vcmask 1041409
        %v168 = vsel %vm167, %v166, %v161
        %vm170 = vcmask 1041408
        %v171 = vsel %vm170, %v168, 0.0
        %v172 = vrot.slane %v171, 4
        %v173 = vadd.f32 %v171, %v172
        %v174 = vrot.slane %v173, 2
        %v175 = vadd.f32 %v173, %v174
        %v176 = vrot.slane %v175, 1
        %v177 = vadd.f32 %v175, %v176
        %v178 = vperm.slane %v161, 0
        %v179 = vperm.slane %v163, 0
        %v180 = vmul.f32 %v178, %v136
        %v181 = vmul.f32 %v179, %v137
        %v182 = vsel %vm140, %v180, 0.0
        %v183 = vsel %vm140, %v181, 0.0
        %v184 = vadd.f32 %v182, %v183
        %v185 = vrcp.pop %v177
        %v186 = vmul.f32 %v177, %v185
        %v187 = vsub.f32 1.0, %v186
        %v188 = vmul.f32 %v185, %v187
        %v189 = vadd.f32 %v185, %v188
        %vm190 = vweird.f32 %v177
        %vm191 = vweird.f32 %v185
        %vm192 = vmor %vm190, %vm191
        %v193 = vsel %vm192, %v185, %v189
        %v194 = vand.u32 2147483647, %v177
        %vm195 = vcmp.eq.f32.partialorder %v194, 8.507059e+37
        %v196 = vand.u32 %v177, 2147483648
        %v197 = vor.u32 1.1754944e-38, %v196
        %v198 = vsel %vm195, %v197, %v193
        %v199 = vperm.slane %v198, 0
        %v200 = vmul.f32 %v184, %v199
        %201 = vst [vmem:[%s135] sm:$0xf] %v200
        %s202 = sand.u32 %s52, 1
        %s203 = scalar_lea.sflag [#allocation4], %s202
        %s204 = sand.u32 %s52, 1
        %s205 = smul.addr %s204, 4
        %s206 = scalar_lea.vmem [#allocation5], %s205
        // Predicated region
        $region29: #{tpu_custom_call.1} parent=23 // pred_check
          %p207 = pneg %p62
        $region30: #{tpu_custom_call.1} parent=23 // pred_check_branch
          %209 = sbr.rel (%p207) target = $region32
        $region31: #{tpu_custom_call.1} parent=23 // pred_region
          %211 = vsyncadd %s203, 0
          %s212 = smul.addr %s18, 4
          %s213 = scalar_lea.hbm %s1, %s212
          %s215 = sshll.u32 %s206, 4
          %s216 = int_to_ptr.vmem [resolvable:$true] %s215
          %s217 = sshll.u32 %s213, 4
          %s218 = int_to_ptr.hbm [resolvable:$true] %s217
          %220 = dma.vmem_to_hbm [thread:$0]  %s216, 64, %s218, %s203
        $region32: #{tpu_custom_call.1} parent=23 // pred_fallthru
          _
      $region24: #{tpu_custom_call.1} parent=5 // pred_fallthru
        _
      %p221 = scmp.le.s32.totalorder 2, %s13
      // Predicated region
      $region33: #{tpu_custom_call.1} parent=5 // pred_check
        %p222 = pneg %p221
      $region34: #{tpu_custom_call.1} parent=5 // pred_check_branch
        %224 = sbr.rel (%p222) target = $region36
      $region35: #{tpu_custom_call.1} parent=5 // pred_region
        %s225 = ssub.s32 %s13, 2
        // Predicated region
        $region37: #{tpu_custom_call.1} parent=35 // pred_check
          %p226 = pneg %p68
        $region38: #{tpu_custom_call.1} parent=35 // pred_check_branch
          %228 = sbr.rel (%p226) target = $region40
        $region39: #{tpu_custom_call.1} parent=35 // pred_region
          %s229 = sand.u32 %s53, 1
          %s230 = scalar_lea.sflag [#allocation4], %s229
          %s231 = sand.u32 %s53, 1
          %s232 = smul.addr %s231, 4
          %s233 = scalar_lea.vmem [#allocation5], %s232
          %235 = dma.done %s230, 64
        $region40: #{tpu_custom_call.1} parent=35 // pred_fallthru
          _
      $region36: #{tpu_custom_call.1} parent=5 // pred_fallthru
        _
    $region6: #{tpu_custom_call.1} parent=1 // loop_footer
      %s17 = sadd.s32 1, %s13
    $region7: #{tpu_custom_call.1} parent=1 // loop_footer_branch
      %12 = sbr.rel target = $region3
    $region8: #{tpu_custom_call.1} parent=1 // loop_exit
      _
    %236 = vsyncpa [#allocation3], 1
    %s237 = scalar_lea.sflag [#allocation3], 1
    %238 = vsyncpa %s237, 1
    %239 = vsyncpa [#allocation4], 1
    %s240 = scalar_lea.sflag [#allocation4], 1
    %241 = vsyncpa %s240, 1

</llo_original>
